<compile_context>
chip_gen: v6e
topology: v6e:2x2x1
jax: 0.10.0
libtpu: 0.0.40
codegen_flags: <defaults>
</compile_context>

<pallas_src>
import jax
import jax.numpy as jnp
from jax import lax
from jax.experimental import pallas as pl
from jax.experimental.pallas import tpu as pltpu

_LANE = 128  # TPU lane width; n_steps is padded up to this.


def _make_timesteps_kernel(n_steps: int):
    """Build a kernel statically closed over the number of valid steps."""
    # Hillis-Steele inclusive scan needs ceil(log2(n_steps)) steps; pad lanes
    # start at zero probability so they never contaminate the valid prefix.
    num_scan_steps = (n_steps - 1).bit_length() if n_steps > 1 else 0

    def kernel(theta_ref, out_ref):
        # theta_ref: (1, _LANE) f32; lanes >= n_steps are padding (any value).
        lane = lax.broadcasted_iota(jnp.int32, (1, _LANE), 1)
        valid = lane < n_steps

        # Numerically-stable masked softmax numerator (VPU + EUP).
        theta = jnp.where(valid, theta_ref[...], -jnp.inf)
        m = jnp.max(theta, axis=-1, keepdims=True)
        # Pad lanes are -inf, so exp(theta - m) == 0 there exactly; no extra
        # select is needed.
        e = jnp.exp(theta - m)
        s = jnp.sum(e, axis=-1, keepdims=True)

        # Normalization factor off the VPU critical path: EUP approx
        # reciprocal + one Newton step restores full f32 accuracy (~1e-7 rel
        # error), preserving the 1e-5 sum-to-one tolerance.
        # (Exact fallback if ever needed: inv_s = 1.0 / s.)
        inv_s = pl.reciprocal(s, approx=True)
        inv_s = inv_s * (2.0 - s * inv_s)

        # Inclusive prefix sum of the UN-normalized numerator via shift/add:
        #   t[i] += t[i - 2^k]  for i >= 2^k,   k = 0 .. ceil(log2(n)) - 1
        # pltpu.roll moves elements toward higher lane indices (jnp.roll
        # semantics); the wrap-around contribution must be killed only when
        # the wrap-in source lanes [_LANE - shift, _LANE) could already hold
        # nonzero partial sums.  Before step k the nonzero region extends at
        # most to lane n_steps + (2^k - 1) - 1, so the mask can be statically
        # elided whenever _LANE - shift >= n_steps + shift - 1, i.e.
        #   2*shift <= _LANE - n_steps + 1.
        # For n_steps <= 64 this removes every mask.
        t = e
        for k in range(num_scan_steps):
            shift = 1 << k
            rolled = pltpu.roll(t, shift, axis=1)
            if 2 * shift <= _LANE - n_steps + 1:
                t = t + rolled
            else:
                t = t + jnp.where(lane >= shift, rolled, 0.0)

        # Single vreg-wide multiply; full 128-lane store stays an unmasked vst.
        out_ref[...] = t * inv_s

    return kernel


def learnable_timesteps_forward(theta, image=None, label=None):
    """Concrete LearnableTimesteps.forward.

    Args:
      theta: (n_steps,) f32 learnable parameter.
      image: optional NCHW tensor; only its batch dim is used (broadcast).
      label: unused (kept for signature parity).

    Returns:
      (n_steps,) f32 monotonically increasing timesteps in (0, 1],
      or (B, n_steps) if `image` is provided.
    """
    n = theta.shape[0]
    assert 1 <= n <= _LANE, "n_steps must be in [1, 128] for this kernel"

    # Pad values are irrelevant (kernel masks lanes >= n); with
    # allow_input_fusion the pad/reshape fuses into the custom call's input.
    theta_p = jnp.pad(theta.astype(jnp.float32).reshape(1, n),
                      ((0, 0), (0, _LANE - n)))

    t_padded = pl.pallas_call(
        _make_timesteps_kernel(n),
        out_shape=jax.ShapeDtypeStruct((1, _LANE), jnp.float32),
        compiler_params=pltpu.CompilerParams(allow_input_fusion=[True]),
        cost_estimate=pl.CostEstimate(
            flops=16 * _LANE, transcendentals=_LANE,
            bytes_accessed=2 * _LANE * 4),
    )(theta_p)

    # Slice / broadcast in the wrapper (free in XLA; keeps the kernel's output
    # lane-dense and gridless).
    t = t_padded[0, :n]
    if image is not None:
        b = image.shape[0]
        t = jnp.broadcast_to(t[None, :], (b, n))
    return t


if __name__ == "__main__":
    key = jax.random.PRNGKey(0)
    k_theta, k_img = jax.random.split(key)

    n_steps = 8
    # Learnable parameter (deterministic init).
    theta = jax.random.normal(k_theta, (n_steps,), dtype=jnp.float32)
    # Optional image, NCHW: batch=2, channels=4, spatial=16x16.
    image = jax.random.normal(k_img, (2, 4, 16, 16), dtype=jnp.float32)

    # Without image -> (n_steps,)
    t_vec = jax.block_until_ready(learnable_timesteps_forward(theta))
    # With image -> (B, n_steps)
    t_batched = jax.block_until_ready(
        learnable_timesteps_forward(theta, image=image))

    # Sanity checks against a pure-JAX reference.
    p_ref = jax.nn.softmax(theta)
    t_ref = jnp.cumsum(p_ref)
    assert t_vec.shape == (n_steps,)
    assert t_batched.shape == (2, n_steps)
    assert jnp.allclose(t_vec, t_ref, atol=1e-5)
    assert jnp.allclose(t_batched[0], t_ref, atol=1e-5)
    assert bool(jnp.all(jnp.diff(t_vec) > 0))          # monotone increasing
    assert abs(float(t_vec[-1]) - 1.0) < 1e-5          # last timestep == 1

    print("KERNEL_OK")
</pallas_src>

<mosaic_0001>
module attributes {stable_mosaic.version = 11 : i64} {
  func.func @kernel(%arg0: memref<1x128xf32, #tpu.memory_space<vmem>>, %arg1: memref<1x128xf32, #tpu.memory_space<vmem>>) attributes {dimension_semantics = [], scalar_prefetch = 0 : i64, scratch_operands = 0 : i64, tpu.core_type = #tpu.core_type<tc>} {
    %0 = tpu.iota {dimensions = array<i32: 1>} : vector<1x128xi32>
    %c8_i32 = arith.constant 8 : i32
    %1 = vector.broadcast %c8_i32 : i32 to vector<1x128xi32>
    %2 = arith.cmpi slt, %0, %1 : vector<1x128xi32>
    %c0 = arith.constant 0 : index
    %c0_0 = arith.constant 0 : index
    %3 = vector.load %arg0[%c0, %c0_0] : memref<1x128xf32, #tpu.memory_space<vmem>>, vector<1x128xf32>
    %cst = arith.constant 0xFF800000 : f32
    %4 = vector.broadcast %cst : f32 to vector<1x128xf32>
    %5 = arith.select %2, %3, %4 : vector<1x128xi1>, vector<1x128xf32>
    %cst_1 = arith.constant dense<0xFF800000> : vector<1xf32>
    %6 = vector.multi_reduction <maximumf>, %5, %cst_1 [1] : vector<1x128xf32> to vector<1xf32>
    %7 = vector.shape_cast %6 : vector<1xf32> to vector<1x1xf32>
    %8 = vector.broadcast %7 : vector<1x1xf32> to vector<1x128xf32>
    %9 = arith.subf %5, %8 : vector<1x128xf32>
    %10 = math.exp %9 : vector<1x128xf32>
    %cst_2 = arith.constant dense<0.000000e+00> : vector<1xf32>
    %11 = vector.multi_reduction <add>, %10, %cst_2 [1] : vector<1x128xf32> to vector<1xf32>
    %12 = vector.shape_cast %11 : vector<1xf32> to vector<1x1xf32>
    %13 = tpu.reciprocal %12 {approx = true} : vector<1x1xf32> -> vector<1x1xf32>
    %14 = arith.mulf %12, %13 : vector<1x1xf32>
    %cst_3 = arith.constant 2.000000e+00 : f32
    %15 = vector.broadcast %cst_3 : f32 to vector<1x1xf32>
    %16 = arith.subf %15, %14 : vector<1x1xf32>
    %17 = arith.mulf %13, %16 : vector<1x1xf32>
    %c1_i32 = arith.constant 1 : i32
    %18 = tpu.dynamic_rotate %10 by %c1_i32 dim 1 : vector<1x128xf32>, i32 -> vector<1x128xf32>
    %19 = arith.addf %10, %18 : vector<1x128xf32>
    %c2_i32 = arith.constant 2 : i32
    %20 = tpu.dynamic_rotate %19 by %c2_i32 dim 1 : vector<1x128xf32>, i32 -> vector<1x128xf32>
    %21 = arith.addf %19, %20 : vector<1x128xf32>
    %c4_i32 = arith.constant 4 : i32
    %22 = tpu.dynamic_rotate %21 by %c4_i32 dim 1 : vector<1x128xf32>, i32 -> vector<1x128xf32>
    %23 = arith.addf %21, %22 : vector<1x128xf32>
    %24 = vector.broadcast %17 : vector<1x1xf32> to vector<1x128xf32>
    %25 = arith.mulf %23, %24 : vector<1x128xf32>
    %c0_4 = arith.constant 0 : index
    %c0_5 = arith.constant 0 : index
    %26 = vector.load %arg1[%c0_4, %c0_5] : memref<1x128xf32, #tpu.memory_space<vmem>>, vector<1x128xf32>
    tpu.vector_store %arg1[%c0_4, %c0_5], %25 {strides = array<i32>} : memref<1x128xf32, #tpu.memory_space<vmem>>, vector<1x128xf32>,
    return
  }
}

</mosaic_0001>

<llo_original>
// kernel: tpu_custom_call.1
$region0: #{tpu_custom_call.1}
  #allocation0 [shape = 'u32[]', space=smem, size = 0x4, offset = 0x4, fixed_abs, tag = 'smem constant byte address 0x4 - core index']
  #allocation1 [shape = 'u32[144,128]{1,0:T(1,128)}', space=vmem, size = 0x12000, scoped, tag = 'internal scratch']
  %s0 = inlined_call_operand.hbm [shape: f32[1,128], index: 0, kind: input, shape index: {}]
  %s1 = inlined_call_operand.hbm [shape: f32[1,128], index: 1, kind: output, shape index: {}]
  %s2 = sld [smem:[#allocation0]]
  $region18: #{tpu_custom_call.1} parent=0
    _
  %s4 = ssub.s32 1, %s2
  %s5 = scalar_select 0, %s4, %s2
  $region1: #{tpu_custom_call.1} parent=0
    #allocation2 [shape = 'u8[512]{0}', space=vmem, size = 0x400, scoped, tag = 'input window, operand 0, single buffered']
    #allocation3 [shape = 's32[1]{0}', space=sflag, size = 0x4, scoped, tag = 'scoped memory for tpu_custom_call.1']
    #allocation4 [shape = 's32[1]{0}', space=sflag, size = 0x4, scoped, tag = 'scoped memory for tpu_custom_call.1']
    #allocation5 [shape = 'u8[512]{0}', space=vmem, size = 0x400, scoped, tag = 'output window, operand 0, single buffered']
    %6 = vsyncpa [#allocation3], 0
    %7 = vsyncpa [#allocation4], 0
    // Predicated region
    $region2: #{tpu_custom_call.1} parent=1 // pred_check
      _
    $region3: #{tpu_custom_call.1} parent=1 // pred_check_branch
      %9 = sbr.rel (0) target = $region5
    $region4: #{tpu_custom_call.1} parent=1 // pred_region
      %s11 = ssub.s32 16, 16
      %12 = vsyncadd [#allocation3], %s11
      %s14 = sshll.u32 [#allocation2], 4
      %s15 = int_to_ptr.vmem [resolvable:$true] %s14
      %17 = dma.hbm_to_vmem [thread:$0]  %s0, 16, %s15, [#allocation3]
    $region5: #{tpu_custom_call.1} parent=1 // pred_fallthru
      _
    // Predicated region
    $region6: #{tpu_custom_call.1} parent=1 // pred_check
      _
    $region7: #{tpu_custom_call.1} parent=1 // pred_check_branch
      %19 = sbr.rel (0) target = $region9
    $region8: #{tpu_custom_call.1} parent=1 // pred_region
      %20 = dma.done [#allocation3], 16
    $region9: #{tpu_custom_call.1} parent=1 // pred_fallthru
      _
    %v21 = vlaneseq
    %v22 = vand.u32 %v21, 127
    %vm23 = vcmp.lt.s32.totalorder %v22, 8
    %v24 = vld [vmem:[#allocation2] sm:$0x1]
    %v25 = vsel %vm23, %v24, -inf
    %vm26 = vcmask 1040384
    %v27 = vsel %vm26, %v25, -inf
    %28 = vmax.xlane.f32.xlu0 %v27
    %v29 = vpop.xlane.xlu0 %28
    %v30 = vsub.f32 %v25, %v29
    %v31 = vmul.f32 %v30, 1.442695
    %v32 = vpow.pop %v31
    %v33 = vsel %vm26, %v32, 0.0
    %34 = vadd.xlane.f32.xlu0 %v33
    %v35 = vpop.xlane.xlu0 %34
    %v36 = vrcp.pop %v35
    %v37 = vmul.f32 %v35, %v36
    %v38 = vsub.f32 2.0, %v37
    %v39 = vmul.f32 %v36, %v38
    %40 = vrot.lane.b32.xlu0 %v32, 1
    %v41 = vpop.permute.xlu0 %40
    %v42 = vadd.f32 %v32, %v41
    %43 = vrot.lane.b32.xlu0 %v42, 2
    %v44 = vpop.permute.xlu0 %43
    %v45 = vadd.f32 %v42, %v44
    %46 = vrot.lane.b32.xlu0 %v45, 4
    %v47 = vpop.permute.xlu0 %46
    %v48 = vadd.f32 %v45, %v47
    %v49 = vmul.f32 %v48, %v39
    %50 = vst [vmem:[#allocation5] sm:$0x1] %v49
    // Predicated region
    $region10: #{tpu_custom_call.1} parent=1 // pred_check
      _
    $region11: #{tpu_custom_call.1} parent=1 // pred_check_branch
      %52 = sbr.rel (0) target = $region13
    $region12: #{tpu_custom_call.1} parent=1 // pred_region
      %s54 = ssub.s32 16, 16
      %55 = vsyncadd [#allocation4], %s54
      %s57 = sshll.u32 [#allocation5], 4
      %s58 = int_to_ptr.vmem [resolvable:$true] %s57
      %60 = dma.vmem_to_hbm [thread:$0]  %s58, 16, %s1, [#allocation4]
    $region13: #{tpu_custom_call.1} parent=1 // pred_fallthru
      _
    // Predicated region
    $region14: #{tpu_custom_call.1} parent=1 // pred_check
      _
    $region15: #{tpu_custom_call.1} parent=1 // pred_check_branch
      %62 = sbr.rel (0) target = $region17
    $region16: #{tpu_custom_call.1} parent=1 // pred_region
      %63 = dma.done [#allocation4], 16
    $region17: #{tpu_custom_call.1} parent=1 // pred_fallthru
      _
    %64 = vsyncpa [#allocation3], 1
    %65 = vsyncpa [#allocation4], 1

</llo_original>
